<compile_context>
chip_gen: v5e
topology: v5e:2x2
jax: 0.10.0
libtpu: 0.0.40
codegen_flags: <defaults>
</compile_context>

<pallas_src>
import jax
import jax.numpy as jnp
from jax import lax
from jax.experimental import pallas as pl
from jax.experimental.pallas import tpu as pltpu

IN, H1, H2, OUT = 8, 6, 4, 1
SUB_S, SUB_L = 8, 128
SUB = SUB_S * SUB_L                      # 1024 samples per (8,128) sub-block

# Flat offsets inside the packed SMEM parameter vector (tanh-folded form).
_W1 = 0                                  # (6,8) row-major -> 48
_B1 = _W1 + H1 * IN                      # 48..53
_W2 = _B1 + H1                           # 54..77
_B2 = _W2 + H2 * H1                      # 78..81
_W3 = _B2 + H2                           # 82..85
_B3 = _W3 + OUT * H2                     # 86
NPARAM = 128                             # pad -> tiny, SMEM-friendly


def mlp_kernel(x_ref, p_ref, o_ref):
    """x_ref: (IN, nsub, 8, 128) VMEM tile.  p_ref: (NPARAM,) f32 in SMEM.
    o_ref: (OUT, nsub, 8, 128) VMEM tile."""
    nsub = x_ref.shape[1]

    def body(s, carry):
        # Full-occupancy feature planes for this 1024-sample sub-block.
        x = [x_ref[k, s] for k in range(IN)]                  # 8 x (8,128)

        def affine(h, w_off, b_off, n_out, n_in):
            # out_j = b[j] + sum_k w[j,k] * h[k]  (scalar-splat FMAs on the VPU)
            outs = []
            for j in range(n_out):
                acc = p_ref[w_off + j * n_in] * h[0] + p_ref[b_off + j]
                for k in range(1, n_in):
                    acc = acc + p_ref[w_off + j * n_in + k] * h[k]
                outs.append(acc)
            return outs

        # Layers 1-2: tanh planes (sigmoid affine already folded into weights).
        t1 = [jnp.tanh(a) for a in affine(x, _W1, _B1, H1, IN)]    # 6 planes
        t2 = [jnp.tanh(a) for a in affine(t1, _W2, _B2, H2, H1)]   # 4 planes
        # Layer 3: only the final 0.5*tanh+0.5 stays explicit.
        a3 = affine(t2, _W3, _B3, OUT, H2)[0]
        o_ref[0, s] = 0.5 * jnp.tanh(a3) + 0.5
        return carry

    lax.fori_loop(0, nsub, body, 0)


def pack_params(params):
    """Pack PyTorch-native (out,in)/(out,) params into one flat f32 vector,
    folding sigmoid(z) = 0.5*tanh(0.5*z)+0.5 into the weights of layers 2/3."""
    w1, b1 = params["w1"], params["b1"]
    w2, b2 = params["w2"], params["b2"]
    w3, b3 = params["w3"], params["b3"]
    w1p, b1p = 0.5 * w1, 0.5 * b1                                  # a1 = 0.5*z1
    w2p, b2p = 0.25 * w2, 0.25 * jnp.sum(w2, axis=1) + 0.5 * b2    # a2 = 0.5*z2
    w3p, b3p = 0.25 * w3, 0.25 * jnp.sum(w3, axis=1) + 0.5 * b3    # a3 = 0.5*z3
    flat = jnp.concatenate(
        [w1p.ravel(), b1p, w2p.ravel(), b2p, w3p.ravel(), b3p]).astype(jnp.float32)
    return jnp.zeros((NPARAM,), jnp.float32).at[: flat.shape[0]].set(flat)


def mlp_forward(x, packed, block_b=65536):
    """x: (B, 8) float32 (PyTorch layout).  Returns (B, 1) float32."""
    B = x.shape[0]
    b_pad = pl.cdiv(max(B, 1), SUB) * SUB
    blk = max(SUB, (min(block_b, b_pad) // SUB) * SUB)
    # v7x: keep at least 2 grid steps (both TensorCores) when the batch allows.
    if blk == b_pad and b_pad >= 2 * SUB:
        blk = max(SUB, (b_pad // (2 * SUB)) * SUB)
    b_pad = pl.cdiv(b_pad, blk) * blk
    nsub = blk // SUB

    # TODO(synk): ideally the producer emits x already as (IN, B); this pad +
    # transpose is a separate XLA pass over all of x.
    x_t = jnp.zeros((IN, b_pad), jnp.float32).at[:, :B].set(x.astype(jnp.float32).T)
    x_t = x_t.reshape(IN, b_pad // SUB, SUB_S, SUB_L)      # free reshape

    y = pl.pallas_call(
        mlp_kernel,
        out_shape=jax.ShapeDtypeStruct((OUT, b_pad // SUB, SUB_S, SUB_L), jnp.float32),
        grid=(b_pad // blk,),
        in_specs=[
            pl.BlockSpec((IN, nsub, SUB_S, SUB_L), lambda i: (0, i, 0, 0)),
            pl.BlockSpec(memory_space=pltpu.MemorySpace.SMEM),   # 87 scalar params
        ],
        out_specs=pl.BlockSpec((OUT, nsub, SUB_S, SUB_L), lambda i: (0, i, 0, 0)),
        compiler_params=pltpu.CompilerParams(
            dimension_semantics=("parallel",),                   # 2-TC on v7x
            vmem_limit_bytes=32 * 1024 * 1024,                   # headroom incl. v5e
        ),
    )(x_t, packed)

    return y.reshape(OUT, b_pad)[:, :B].T                        # (B, 1)


def init_params(key):
    """PyTorch nn.Linear-style init: weight (out, in), bias (out,)."""
    ks = jax.random.split(key, 6)

    def linear(kw, kb, fan_in, fan_out):
        bound = 1.0 / jnp.sqrt(jnp.float32(fan_in))
        w = jax.random.uniform(kw, (fan_out, fan_in), jnp.float32, -bound, bound)
        b = jax.random.uniform(kb, (fan_out,), jnp.float32, -bound, bound)
        return w, b

    w1, b1 = linear(ks[0], ks[1], IN, H1)
    w2, b2 = linear(ks[2], ks[3], H1, H2)
    w3, b3 = linear(ks[4], ks[5], H2, OUT)
    return {"w1": w1, "b1": b1, "w2": w2, "b2": b2, "w3": w3, "b3": b3}


def reference_forward(x, p):
    h1 = jax.nn.sigmoid(x @ p["w1"].T + p["b1"])
    h2 = jax.nn.sigmoid(h1 @ p["w2"].T + p["b2"])
    return jax.nn.sigmoid(h2 @ p["w3"].T + p["b3"])


if __name__ == "__main__":
    key = jax.random.PRNGKey(0)
    k_x, k_p = jax.random.split(key)
    batch = 8
    x = jax.random.normal(k_x, (batch, IN), jnp.float32)
    params = init_params(k_p)
    packed = pack_params(params)

    y = mlp_forward(x, packed)
    y = jax.block_until_ready(y)

    y_ref = reference_forward(x, params)
    assert y.shape == (batch, OUT)
    # tanh-form sigmoid is exact math -> tight tolerance.
    assert jnp.allclose(y, y_ref, atol=1e-5, rtol=1e-5), float(
        jnp.max(jnp.abs(y - y_ref)))
    print("KERNEL_OK")
</pallas_src>

<mosaic_0001>
module attributes {stable_mosaic.version = 11 : i64} {
  func.func @mlp_kernel(%arg0: i32, %arg1: memref<8x1x8x128xf32, #tpu.memory_space<vmem>>, %arg2: memref<128xf32, #tpu.memory_space<smem>>, %arg3: memref<1x1x8x128xf32, #tpu.memory_space<vmem>>) attributes {dimension_semantics = [#tpu.dimension_semantics<parallel>], iteration_bounds = array<i64: 1>, scalar_prefetch = 0 : i64, scratch_operands = 0 : i64, tpu.core_type = #tpu.core_type<tc>, window_params = [{transform_indices = @transform_0, window_bounds = array<i64: 8, 1, 8, 128>}, {transform_indices = @transform_1, window_bounds = array<i64: 128>}, {transform_indices = @transform_2, window_bounds = array<i64: 1, 1, 8, 128>}]} {
    %c0_i32 = arith.constant 0 : i32
    %c0 = arith.constant 0 : index
    %0 = arith.index_cast %c0_i32 : i32 to index
    %c0_0 = arith.constant 0 : index
    %c0_1 = arith.constant 0 : index
    %1 = vector.load %arg1[%c0, %0, %c0_0, %c0_1] : memref<8x1x8x128xf32, #tpu.memory_space<vmem>>, vector<1x1x8x128xf32>
    %2 = vector.shape_cast %1 : vector<1x1x8x128xf32> to vector<8x128xf32>
    %c1 = arith.constant 1 : index
    %3 = arith.index_cast %c0_i32 : i32 to index
    %c0_2 = arith.constant 0 : index
    %c0_3 = arith.constant 0 : index
    %4 = vector.load %arg1[%c1, %3, %c0_2, %c0_3] : memref<8x1x8x128xf32, #tpu.memory_space<vmem>>, vector<1x1x8x128xf32>
    %5 = vector.shape_cast %4 : vector<1x1x8x128xf32> to vector<8x128xf32>
    %c2 = arith.constant 2 : index
    %6 = arith.index_cast %c0_i32 : i32 to index
    %c0_4 = arith.constant 0 : index
    %c0_5 = arith.constant 0 : index
    %7 = vector.load %arg1[%c2, %6, %c0_4, %c0_5] : memref<8x1x8x128xf32, #tpu.memory_space<vmem>>, vector<1x1x8x128xf32>
    %8 = vector.shape_cast %7 : vector<1x1x8x128xf32> to vector<8x128xf32>
    %c3 = arith.constant 3 : index
    %9 = arith.index_cast %c0_i32 : i32 to index
    %c0_6 = arith.constant 0 : index
    %c0_7 = arith.constant 0 : index
    %10 = vector.load %arg1[%c3, %9, %c0_6, %c0_7] : memref<8x1x8x128xf32, #tpu.memory_space<vmem>>, vector<1x1x8x128xf32>
    %11 = vector.shape_cast %10 : vector<1x1x8x128xf32> to vector<8x128xf32>
    %c4 = arith.constant 4 : index
    %12 = arith.index_cast %c0_i32 : i32 to index
    %c0_8 = arith.constant 0 : index
    %c0_9 = arith.constant 0 : index
    %13 = vector.load %arg1[%c4, %12, %c0_8, %c0_9] : memref<8x1x8x128xf32, #tpu.memory_space<vmem>>, vector<1x1x8x128xf32>
    %14 = vector.shape_cast %13 : vector<1x1x8x128xf32> to vector<8x128xf32>
    %c5 = arith.constant 5 : index
    %15 = arith.index_cast %c0_i32 : i32 to index
    %c0_10 = arith.constant 0 : index
    %c0_11 = arith.constant 0 : index
    %16 = vector.load %arg1[%c5, %15, %c0_10, %c0_11] : memref<8x1x8x128xf32, #tpu.memory_space<vmem>>, vector<1x1x8x128xf32>
    %17 = vector.shape_cast %16 : vector<1x1x8x128xf32> to vector<8x128xf32>
    %c6 = arith.constant 6 : index
    %18 = arith.index_cast %c0_i32 : i32 to index
    %c0_12 = arith.constant 0 : index
    %c0_13 = arith.constant 0 : index
    %19 = vector.load %arg1[%c6, %18, %c0_12, %c0_13] : memref<8x1x8x128xf32, #tpu.memory_space<vmem>>, vector<1x1x8x128xf32>
    %20 = vector.shape_cast %19 : vector<1x1x8x128xf32> to vector<8x128xf32>
    %c7 = arith.constant 7 : index
    %21 = arith.index_cast %c0_i32 : i32 to index
    %c0_14 = arith.constant 0 : index
    %c0_15 = arith.constant 0 : index
    %22 = vector.load %arg1[%c7, %21, %c0_14, %c0_15] : memref<8x1x8x128xf32, #tpu.memory_space<vmem>>, vector<1x1x8x128xf32>
    %23 = vector.shape_cast %22 : vector<1x1x8x128xf32> to vector<8x128xf32>
    %c0_16 = arith.constant 0 : index
    %24 = memref.load %arg2[%c0_16] : memref<128xf32, #tpu.memory_space<smem>>
    %25 = vector.broadcast %24 : f32 to vector<8x128xf32>
    %26 = arith.mulf %25, %2 : vector<8x128xf32>
    %c48 = arith.constant 48 : index
    %27 = memref.load %arg2[%c48] : memref<128xf32, #tpu.memory_space<smem>>
    %28 = vector.broadcast %27 : f32 to vector<8x128xf32>
    %29 = arith.addf %26, %28 : vector<8x128xf32>
    %c1_17 = arith.constant 1 : index
    %30 = memref.load %arg2[%c1_17] : memref<128xf32, #tpu.memory_space<smem>>
    %31 = vector.broadcast %30 : f32 to vector<8x128xf32>
    %32 = arith.mulf %31, %5 : vector<8x128xf32>
    %33 = arith.addf %29, %32 : vector<8x128xf32>
    %c2_18 = arith.constant 2 : index
    %34 = memref.load %arg2[%c2_18] : memref<128xf32, #tpu.memory_space<smem>>
    %35 = vector.broadcast %34 : f32 to vector<8x128xf32>
    %36 = arith.mulf %35, %8 : vector<8x128xf32>
    %37 = arith.addf %33, %36 : vector<8x128xf32>
    %c3_19 = arith.constant 3 : index
    %38 = memref.load %arg2[%c3_19] : memref<128xf32, #tpu.memory_space<smem>>
    %39 = vector.broadcast %38 : f32 to vector<8x128xf32>
    %40 = arith.mulf %39, %11 : vector<8x128xf32>
    %41 = arith.addf %37, %40 : vector<8x128xf32>
    %c4_20 = arith.constant 4 : index
    %42 = memref.load %arg2[%c4_20] : memref<128xf32, #tpu.memory_space<smem>>
    %43 = vector.broadcast %42 : f32 to vector<8x128xf32>
    %44 = arith.mulf %43, %14 : vector<8x128xf32>
    %45 = arith.addf %41, %44 : vector<8x128xf32>
    %c5_21 = arith.constant 5 : index
    %46 = memref.load %arg2[%c5_21] : memref<128xf32, #tpu.memory_space<smem>>
    %47 = vector.broadcast %46 : f32 to vector<8x128xf32>
    %48 = arith.mulf %47, %17 : vector<8x128xf32>
    %49 = arith.addf %45, %48 : vector<8x128xf32>
    %c6_22 = arith.constant 6 : index
    %50 = memref.load %arg2[%c6_22] : memref<128xf32, #tpu.memory_space<smem>>
    %51 = vector.broadcast %50 : f32 to vector<8x128xf32>
    %52 = arith.mulf %51, %20 : vector<8x128xf32>
    %53 = arith.addf %49, %52 : vector<8x128xf32>
    %c7_23 = arith.constant 7 : index
    %54 = memref.load %arg2[%c7_23] : memref<128xf32, #tpu.memory_space<smem>>
    %55 = vector.broadcast %54 : f32 to vector<8x128xf32>
    %56 = arith.mulf %55, %23 : vector<8x128xf32>
    %57 = arith.addf %53, %56 : vector<8x128xf32>
    %c8 = arith.constant 8 : index
    %58 = memref.load %arg2[%c8] : memref<128xf32, #tpu.memory_space<smem>>
    %59 = vector.broadcast %58 : f32 to vector<8x128xf32>
    %60 = arith.mulf %59, %2 : vector<8x128xf32>
    %c49 = arith.constant 49 : index
    %61 = memref.load %arg2[%c49] : memref<128xf32, #tpu.memory_space<smem>>
    %62 = vector.broadcast %61 : f32 to vector<8x128xf32>
    %63 = arith.addf %60, %62 : vector<8x128xf32>
    %c9 = arith.constant 9 : index
    %64 = memref.load %arg2[%c9] : memref<128xf32, #tpu.memory_space<smem>>
    %65 = vector.broadcast %64 : f32 to vector<8x128xf32>
    %66 = arith.mulf %65, %5 : vector<8x128xf32>
    %67 = arith.addf %63, %66 : vector<8x128xf32>
    %c10 = arith.constant 10 : index
    %68 = memref.load %arg2[%c10] : memref<128xf32, #tpu.memory_space<smem>>
    %69 = vector.broadcast %68 : f32 to vector<8x128xf32>
    %70 = arith.mulf %69, %8 : vector<8x128xf32>
    %71 = arith.addf %67, %70 : vector<8x128xf32>
    %c11 = arith.constant 11 : index
    %72 = memref.load %arg2[%c11] : memref<128xf32, #tpu.memory_space<smem>>
    %73 = vector.broadcast %72 : f32 to vector<8x128xf32>
    %74 = arith.mulf %73, %11 : vector<8x128xf32>
    %75 = arith.addf %71, %74 : vector<8x128xf32>
    %c12 = arith.constant 12 : index
    %76 = memref.load %arg2[%c12] : memref<128xf32, #tpu.memory_space<smem>>
    %77 = vector.broadcast %76 : f32 to vector<8x128xf32>
    %78 = arith.mulf %77, %14 : vector<8x128xf32>
    %79 = arith.addf %75, %78 : vector<8x128xf32>
    %c13 = arith.constant 13 : index
    %80 = memref.load %arg2[%c13] : memref<128xf32, #tpu.memory_space<smem>>
    %81 = vector.broadcast %80 : f32 to vector<8x128xf32>
    %82 = arith.mulf %81, %17 : vector<8x128xf32>
    %83 = arith.addf %79, %82 : vector<8x128xf32>
    %c14 = arith.constant 14 : index
    %84 = memref.load %arg2[%c14] : memref<128xf32, #tpu.memory_space<smem>>
    %85 = vector.broadcast %84 : f32 to vector<8x128xf32>
    %86 = arith.mulf %85, %20 : vector<8x128xf32>
    %87 = arith.addf %83, %86 : vector<8x128xf32>
    %c15 = arith.constant 15 : index
    %88 = memref.load %arg2[%c15] : memref<128xf32, #tpu.memory_space<smem>>
    %89 = vector.broadcast %88 : f32 to vector<8x128xf32>
    %90 = arith.mulf %89, %23 : vector<8x128xf32>
    %91 = arith.addf %87, %90 : vector<8x128xf32>
    %c16 = arith.constant 16 : index
    %92 = memref.load %arg2[%c16] : memref<128xf32, #tpu.memory_space<smem>>
    %93 = vector.broadcast %92 : f32 to vector<8x128xf32>
    %94 = arith.mulf %93, %2 : vector<8x128xf32>
    %c50 = arith.constant 50 : index
    %95 = memref.load %arg2[%c50] : memref<128xf32, #tpu.memory_space<smem>>
    %96 = vector.broadcast %95 : f32 to vector<8x128xf32>
    %97 = arith.addf %94, %96 : vector<8x128xf32>
    %c17 = arith.constant 17 : index
    %98 = memref.load %arg2[%c17] : memref<128xf32, #tpu.memory_space<smem>>
    %99 = vector.broadcast %98 : f32 to vector<8x128xf32>
    %100 = arith.mulf %99, %5 : vector<8x128xf32>
    %101 = arith.addf %97, %100 : vector<8x128xf32>
    %c18 = arith.constant 18 : index
    %102 = memref.load %arg2[%c18] : memref<128xf32, #tpu.memory_space<smem>>
    %103 = vector.broadcast %102 : f32 to vector<8x128xf32>
    %104 = arith.mulf %103, %8 : vector<8x128xf32>
    %105 = arith.addf %101, %104 : vector<8x128xf32>
    %c19 = arith.constant 19 : index
    %106 = memref.load %arg2[%c19] : memref<128xf32, #tpu.memory_space<smem>>
    %107 = vector.broadcast %106 : f32 to vector<8x128xf32>
    %108 = arith.mulf %107, %11 : vector<8x128xf32>
    %109 = arith.addf %105, %108 : vector<8x128xf32>
    %c20 = arith.constant 20 : index
    %110 = memref.load %arg2[%c20] : memref<128xf32, #tpu.memory_space<smem>>
    %111 = vector.broadcast %110 : f32 to vector<8x128xf32>
    %112 = arith.mulf %111, %14 : vector<8x128xf32>
    %113 = arith.addf %109, %112 : vector<8x128xf32>
    %c21 = arith.constant 21 : index
    %114 = memref.load %arg2[%c21] : memref<128xf32, #tpu.memory_space<smem>>
    %115 = vector.broadcast %114 : f32 to vector<8x128xf32>
    %116 = arith.mulf %115, %17 : vector<8x128xf32>
    %117 = arith.addf %113, %116 : vector<8x128xf32>
    %c22 = arith.constant 22 : index
    %118 = memref.load %arg2[%c22] : memref<128xf32, #tpu.memory_space<smem>>
    %119 = vector.broadcast %118 : f32 to vector<8x128xf32>
    %120 = arith.mulf %119, %20 : vector<8x128xf32>
    %121 = arith.addf %117, %120 : vector<8x128xf32>
    %c23 = arith.constant 23 : index
    %122 = memref.load %arg2[%c23] : memref<128xf32, #tpu.memory_space<smem>>
    %123 = vector.broadcast %122 : f32 to vector<8x128xf32>
    %124 = arith.mulf %123, %23 : vector<8x128xf32>
    %125 = arith.addf %121, %124 : vector<8x128xf32>
    %c24 = arith.constant 24 : index
    %126 = memref.load %arg2[%c24] : memref<128xf32, #tpu.memory_space<smem>>
    %127 = vector.broadcast %126 : f32 to vector<8x128xf32>
    %128 = arith.mulf %127, %2 : vector<8x128xf32>
    %c51 = arith.constant 51 : index
    %129 = memref.load %arg2[%c51] : memref<128xf32, #tpu.memory_space<smem>>
    %130 = vector.broadcast %129 : f32 to vector<8x128xf32>
    %131 = arith.addf %128, %130 : vector<8x128xf32>
    %c25 = arith.constant 25 : index
    %132 = memref.load %arg2[%c25] : memref<128xf32, #tpu.memory_space<smem>>
    %133 = vector.broadcast %132 : f32 to vector<8x128xf32>
    %134 = arith.mulf %133, %5 : vector<8x128xf32>
    %135 = arith.addf %131, %134 : vector<8x128xf32>
    %c26 = arith.constant 26 : index
    %136 = memref.load %arg2[%c26] : memref<128xf32, #tpu.memory_space<smem>>
    %137 = vector.broadcast %136 : f32 to vector<8x128xf32>
    %138 = arith.mulf %137, %8 : vector<8x128xf32>
    %139 = arith.addf %135, %138 : vector<8x128xf32>
    %c27 = arith.constant 27 : index
    %140 = memref.load %arg2[%c27] : memref<128xf32, #tpu.memory_space<smem>>
    %141 = vector.broadcast %140 : f32 to vector<8x128xf32>
    %142 = arith.mulf %141, %11 : vector<8x128xf32>
    %143 = arith.addf %139, %142 : vector<8x128xf32>
    %c28 = arith.constant 28 : index
    %144 = memref.load %arg2[%c28] : memref<128xf32, #tpu.memory_space<smem>>
    %145 = vector.broadcast %144 : f32 to vector<8x128xf32>
    %146 = arith.mulf %145, %14 : vector<8x128xf32>
    %147 = arith.addf %143, %146 : vector<8x128xf32>
    %c29 = arith.constant 29 : index
    %148 = memref.load %arg2[%c29] : memref<128xf32, #tpu.memory_space<smem>>
    %149 = vector.broadcast %148 : f32 to vector<8x128xf32>
    %150 = arith.mulf %149, %17 : vector<8x128xf32>
    %151 = arith.addf %147, %150 : vector<8x128xf32>
    %c30 = arith.constant 30 : index
    %152 = memref.load %arg2[%c30] : memref<128xf32, #tpu.memory_space<smem>>
    %153 = vector.broadcast %152 : f32 to vector<8x128xf32>
    %154 = arith.mulf %153, %20 : vector<8x128xf32>
    %155 = arith.addf %151, %154 : vector<8x128xf32>
    %c31 = arith.constant 31 : index
    %156 = memref.load %arg2[%c31] : memref<128xf32, #tpu.memory_space<smem>>
    %157 = vector.broadcast %156 : f32 to vector<8x128xf32>
    %158 = arith.mulf %157, %23 : vector<8x128xf32>
    %159 = arith.addf %155, %158 : vector<8x128xf32>
    %c32 = arith.constant 32 : index
    %160 = memref.load %arg2[%c32] : memref<128xf32, #tpu.memory_space<smem>>
    %161 = vector.broadcast %160 : f32 to vector<8x128xf32>
    %162 = arith.mulf %161, %2 : vector<8x128xf32>
    %c52 = arith.constant 52 : index
    %163 = memref.load %arg2[%c52] : memref<128xf32, #tpu.memory_space<smem>>
    %164 = vector.broadcast %163 : f32 to vector<8x128xf32>
    %165 = arith.addf %162, %164 : vector<8x128xf32>
    %c33 = arith.constant 33 : index
    %166 = memref.load %arg2[%c33] : memref<128xf32, #tpu.memory_space<smem>>
    %167 = vector.broadcast %166 : f32 to vector<8x128xf32>
    %168 = arith.mulf %167, %5 : vector<8x128xf32>
    %169 = arith.addf %165, %168 : vector<8x128xf32>
    %c34 = arith.constant 34 : index
    %170 = memref.load %arg2[%c34] : memref<128xf32, #tpu.memory_space<smem>>
    %171 = vector.broadcast %170 : f32 to vector<8x128xf32>
    %172 = arith.mulf %171, %8 : vector<8x128xf32>
    %173 = arith.addf %169, %172 : vector<8x128xf32>
    %c35 = arith.constant 35 : index
    %174 = memref.load %arg2[%c35] : memref<128xf32, #tpu.memory_space<smem>>
    %175 = vector.broadcast %174 : f32 to vector<8x128xf32>
    %176 = arith.mulf %175, %11 : vector<8x128xf32>
    %177 = arith.addf %173, %176 : vector<8x128xf32>
    %c36 = arith.constant 36 : index
    %178 = memref.load %arg2[%c36] : memref<128xf32, #tpu.memory_space<smem>>
    %179 = vector.broadcast %178 : f32 to vector<8x128xf32>
    %180 = arith.mulf %179, %14 : vector<8x128xf32>
    %181 = arith.addf %177, %180 : vector<8x128xf32>
    %c37 = arith.constant 37 : index
    %182 = memref.load %arg2[%c37] : memref<128xf32, #tpu.memory_space<smem>>
    %183 = vector.broadcast %182 : f32 to vector<8x128xf32>
    %184 = arith.mulf %183, %17 : vector<8x128xf32>
    %185 = arith.addf %181, %184 : vector<8x128xf32>
    %c38 = arith.constant 38 : index
    %186 = memref.load %arg2[%c38] : memref<128xf32, #tpu.memory_space<smem>>
    %187 = vector.broadcast %186 : f32 to vector<8x128xf32>
    %188 = arith.mulf %187, %20 : vector<8x128xf32>
    %189 = arith.addf %185, %188 : vector<8x128xf32>
    %c39 = arith.constant 39 : index
    %190 = memref.load %arg2[%c39] : memref<128xf32, #tpu.memory_space<smem>>
    %191 = vector.broadcast %190 : f32 to vector<8x128xf32>
    %192 = arith.mulf %191, %23 : vector<8x128xf32>
    %193 = arith.addf %189, %192 : vector<8x128xf32>
    %c40 = arith.constant 40 : index
    %194 = memref.load %arg2[%c40] : memref<128xf32, #tpu.memory_space<smem>>
    %195 = vector.broadcast %194 : f32 to vector<8x128xf32>
    %196 = arith.mulf %195, %2 : vector<8x128xf32>
    %c53 = arith.constant 53 : index
    %197 = memref.load %arg2[%c53] : memref<128xf32, #tpu.memory_space<smem>>
    %198 = vector.broadcast %197 : f32 to vector<8x128xf32>
    %199 = arith.addf %196, %198 : vector<8x128xf32>
    %c41 = arith.constant 41 : index
    %200 = memref.load %arg2[%c41] : memref<128xf32, #tpu.memory_space<smem>>
    %201 = vector.broadcast %200 : f32 to vector<8x128xf32>
    %202 = arith.mulf %201, %5 : vector<8x128xf32>
    %203 = arith.addf %199, %202 : vector<8x128xf32>
    %c42 = arith.constant 42 : index
    %204 = memref.load %arg2[%c42] : memref<128xf32, #tpu.memory_space<smem>>
    %205 = vector.broadcast %204 : f32 to vector<8x128xf32>
    %206 = arith.mulf %205, %8 : vector<8x128xf32>
    %207 = arith.addf %203, %206 : vector<8x128xf32>
    %c43 = arith.constant 43 : index
    %208 = memref.load %arg2[%c43] : memref<128xf32, #tpu.memory_space<smem>>
    %209 = vector.broadcast %208 : f32 to vector<8x128xf32>
    %210 = arith.mulf %209, %11 : vector<8x128xf32>
    %211 = arith.addf %207, %210 : vector<8x128xf32>
    %c44 = arith.constant 44 : index
    %212 = memref.load %arg2[%c44] : memref<128xf32, #tpu.memory_space<smem>>
    %213 = vector.broadcast %212 : f32 to vector<8x128xf32>
    %214 = arith.mulf %213, %14 : vector<8x128xf32>
    %215 = arith.addf %211, %214 : vector<8x128xf32>
    %c45 = arith.constant 45 : index
    %216 = memref.load %arg2[%c45] : memref<128xf32, #tpu.memory_space<smem>>
    %217 = vector.broadcast %216 : f32 to vector<8x128xf32>
    %218 = arith.mulf %217, %17 : vector<8x128xf32>
    %219 = arith.addf %215, %218 : vector<8x128xf32>
    %c46 = arith.constant 46 : index
    %220 = memref.load %arg2[%c46] : memref<128xf32, #tpu.memory_space<smem>>
    %221 = vector.broadcast %220 : f32 to vector<8x128xf32>
    %222 = arith.mulf %221, %20 : vector<8x128xf32>
    %223 = arith.addf %219, %222 : vector<8x128xf32>
    %c47 = arith.constant 47 : index
    %224 = memref.load %arg2[%c47] : memref<128xf32, #tpu.memory_space<smem>>
    %225 = vector.broadcast %224 : f32 to vector<8x128xf32>
    %226 = arith.mulf %225, %23 : vector<8x128xf32>
    %227 = arith.addf %223, %226 : vector<8x128xf32>
    %228 = math.tanh %57 : vector<8x128xf32>
    %229 = math.tanh %91 : vector<8x128xf32>
    %230 = math.tanh %125 : vector<8x128xf32>
    %231 = math.tanh %159 : vector<8x128xf32>
    %232 = math.tanh %193 : vector<8x128xf32>
    %233 = math.tanh %227 : vector<8x128xf32>
    %c54 = arith.constant 54 : index
    %234 = memref.load %arg2[%c54] : memref<128xf32, #tpu.memory_space<smem>>
    %235 = vector.broadcast %234 : f32 to vector<8x128xf32>
    %236 = arith.mulf %235, %228 : vector<8x128xf32>
    %c78 = arith.constant 78 : index
    %237 = memref.load %arg2[%c78] : memref<128xf32, #tpu.memory_space<smem>>
    %238 = vector.broadcast %237 : f32 to vector<8x128xf32>
    %239 = arith.addf %236, %238 : vector<8x128xf32>
    %c55 = arith.constant 55 : index
    %240 = memref.load %arg2[%c55] : memref<128xf32, #tpu.memory_space<smem>>
    %241 = vector.broadcast %240 : f32 to vector<8x128xf32>
    %242 = arith.mulf %241, %229 : vector<8x128xf32>
    %243 = arith.addf %239, %242 : vector<8x128xf32>
    %c56 = arith.constant 56 : index
    %244 = memref.load %arg2[%c56] : memref<128xf32, #tpu.memory_space<smem>>
    %245 = vector.broadcast %244 : f32 to vector<8x128xf32>
    %246 = arith.mulf %245, %230 : vector<8x128xf32>
    %247 = arith.addf %243, %246 : vector<8x128xf32>
    %c57 = arith.constant 57 : index
    %248 = memref.load %arg2[%c57] : memref<128xf32, #tpu.memory_space<smem>>
    %249 = vector.broadcast %248 : f32 to vector<8x128xf32>
    %250 = arith.mulf %249, %231 : vector<8x128xf32>
    %251 = arith.addf %247, %250 : vector<8x128xf32>
    %c58 = arith.constant 58 : index
    %252 = memref.load %arg2[%c58] : memref<128xf32, #tpu.memory_space<smem>>
    %253 = vector.broadcast %252 : f32 to vector<8x128xf32>
    %254 = arith.mulf %253, %232 : vector<8x128xf32>
    %255 = arith.addf %251, %254 : vector<8x128xf32>
    %c59 = arith.constant 59 : index
    %256 = memref.load %arg2[%c59] : memref<128xf32, #tpu.memory_space<smem>>
    %257 = vector.broadcast %256 : f32 to vector<8x128xf32>
    %258 = arith.mulf %257, %233 : vector<8x128xf32>
    %259 = arith.addf %255, %258 : vector<8x128xf32>
    %c60 = arith.constant 60 : index
    %260 = memref.load %arg2[%c60] : memref<128xf32, #tpu.memory_space<smem>>
    %261 = vector.broadcast %260 : f32 to vector<8x128xf32>
    %262 = arith.mulf %261, %228 : vector<8x128xf32>
    %c79 = arith.constant 79 : index
    %263 = memref.load %arg2[%c79] : memref<128xf32, #tpu.memory_space<smem>>
    %264 = vector.broadcast %263 : f32 to vector<8x128xf32>
    %265 = arith.addf %262, %264 : vector<8x128xf32>
    %c61 = arith.constant 61 : index
    %266 = memref.load %arg2[%c61] : memref<128xf32, #tpu.memory_space<smem>>
    %267 = vector.broadcast %266 : f32 to vector<8x128xf32>
    %268 = arith.mulf %267, %229 : vector<8x128xf32>
    %269 = arith.addf %265, %268 : vector<8x128xf32>
    %c62 = arith.constant 62 : index
    %270 = memref.load %arg2[%c62] : memref<128xf32, #tpu.memory_space<smem>>
    %271 = vector.broadcast %270 : f32 to vector<8x128xf32>
    %272 = arith.mulf %271, %230 : vector<8x128xf32>
    %273 = arith.addf %269, %272 : vector<8x128xf32>
    %c63 = arith.constant 63 : index
    %274 = memref.load %arg2[%c63] : memref<128xf32, #tpu.memory_space<smem>>
    %275 = vector.broadcast %274 : f32 to vector<8x128xf32>
    %276 = arith.mulf %275, %231 : vector<8x128xf32>
    %277 = arith.addf %273, %276 : vector<8x128xf32>
    %c64 = arith.constant 64 : index
    %278 = memref.load %arg2[%c64] : memref<128xf32, #tpu.memory_space<smem>>
    %279 = vector.broadcast %278 : f32 to vector<8x128xf32>
    %280 = arith.mulf %279, %232 : vector<8x128xf32>
    %281 = arith.addf %277, %280 : vector<8x128xf32>
    %c65 = arith.constant 65 : index
    %282 = memref.load %arg2[%c65] : memref<128xf32, #tpu.memory_space<smem>>
    %283 = vector.broadcast %282 : f32 to vector<8x128xf32>
    %284 = arith.mulf %283, %233 : vector<8x128xf32>
    %285 = arith.addf %281, %284 : vector<8x128xf32>
    %c66 = arith.constant 66 : index
    %286 = memref.load %arg2[%c66] : memref<128xf32, #tpu.memory_space<smem>>
    %287 = vector.broadcast %286 : f32 to vector<8x128xf32>
    %288 = arith.mulf %287, %228 : vector<8x128xf32>
    %c80 = arith.constant 80 : index
    %289 = memref.load %arg2[%c80] : memref<128xf32, #tpu.memory_space<smem>>
    %290 = vector.broadcast %289 : f32 to vector<8x128xf32>
    %291 = arith.addf %288, %290 : vector<8x128xf32>
    %c67 = arith.constant 67 : index
    %292 = memref.load %arg2[%c67] : memref<128xf32, #tpu.memory_space<smem>>
    %293 = vector.broadcast %292 : f32 to vector<8x128xf32>
    %294 = arith.mulf %293, %229 : vector<8x128xf32>
    %295 = arith.addf %291, %294 : vector<8x128xf32>
    %c68 = arith.constant 68 : index
    %296 = memref.load %arg2[%c68] : memref<128xf32, #tpu.memory_space<smem>>
    %297 = vector.broadcast %296 : f32 to vector<8x128xf32>
    %298 = arith.mulf %297, %230 : vector<8x128xf32>
    %299 = arith.addf %295, %298 : vector<8x128xf32>
    %c69 = arith.constant 69 : index
    %300 = memref.load %arg2[%c69] : memref<128xf32, #tpu.memory_space<smem>>
    %301 = vector.broadcast %300 : f32 to vector<8x128xf32>
    %302 = arith.mulf %301, %231 : vector<8x128xf32>
    %303 = arith.addf %299, %302 : vector<8x128xf32>
    %c70 = arith.constant 70 : index
    %304 = memref.load %arg2[%c70] : memref<128xf32, #tpu.memory_space<smem>>
    %305 = vector.broadcast %304 : f32 to vector<8x128xf32>
    %306 = arith.mulf %305, %232 : vector<8x128xf32>
    %307 = arith.addf %303, %306 : vector<8x128xf32>
    %c71 = arith.constant 71 : index
    %308 = memref.load %arg2[%c71] : memref<128xf32, #tpu.memory_space<smem>>
    %309 = vector.broadcast %308 : f32 to vector<8x128xf32>
    %310 = arith.mulf %309, %233 : vector<8x128xf32>
    %311 = arith.addf %307, %310 : vector<8x128xf32>
    %c72 = arith.constant 72 : index
    %312 = memref.load %arg2[%c72] : memref<128xf32, #tpu.memory_space<smem>>
    %313 = vector.broadcast %312 : f32 to vector<8x128xf32>
    %314 = arith.mulf %313, %228 : vector<8x128xf32>
    %c81 = arith.constant 81 : index
    %315 = memref.load %arg2[%c81] : memref<128xf32, #tpu.memory_space<smem>>
    %316 = vector.broadcast %315 : f32 to vector<8x128xf32>
    %317 = arith.addf %314, %316 : vector<8x128xf32>
    %c73 = arith.constant 73 : index
    %318 = memref.load %arg2[%c73] : memref<128xf32, #tpu.memory_space<smem>>
    %319 = vector.broadcast %318 : f32 to vector<8x128xf32>
    %320 = arith.mulf %319, %229 : vector<8x128xf32>
    %321 = arith.addf %317, %320 : vector<8x128xf32>
    %c74 = arith.constant 74 : index
    %322 = memref.load %arg2[%c74] : memref<128xf32, #tpu.memory_space<smem>>
    %323 = vector.broadcast %322 : f32 to vector<8x128xf32>
    %324 = arith.mulf %323, %230 : vector<8x128xf32>
    %325 = arith.addf %321, %324 : vector<8x128xf32>
    %c75 = arith.constant 75 : index
    %326 = memref.load %arg2[%c75] : memref<128xf32, #tpu.memory_space<smem>>
    %327 = vector.broadcast %326 : f32 to vector<8x128xf32>
    %328 = arith.mulf %327, %231 : vector<8x128xf32>
    %329 = arith.addf %325, %328 : vector<8x128xf32>
    %c76 = arith.constant 76 : index
    %330 = memref.load %arg2[%c76] : memref<128xf32, #tpu.memory_space<smem>>
    %331 = vector.broadcast %330 : f32 to vector<8x128xf32>
    %332 = arith.mulf %331, %232 : vector<8x128xf32>
    %333 = arith.addf %329, %332 : vector<8x128xf32>
    %c77 = arith.constant 77 : index
    %334 = memref.load %arg2[%c77] : memref<128xf32, #tpu.memory_space<smem>>
    %335 = vector.broadcast %334 : f32 to vector<8x128xf32>
    %336 = arith.mulf %335, %233 : vector<8x128xf32>
    %337 = arith.addf %333, %336 : vector<8x128xf32>
    %338 = math.tanh %259 : vector<8x128xf32>
    %339 = math.tanh %285 : vector<8x128xf32>
    %340 = math.tanh %311 : vector<8x128xf32>
    %341 = math.tanh %337 : vector<8x128xf32>
    %c82 = arith.constant 82 : index
    %342 = memref.load %arg2[%c82] : memref<128xf32, #tpu.memory_space<smem>>
    %343 = vector.broadcast %342 : f32 to vector<8x128xf32>
    %344 = arith.mulf %343, %338 : vector<8x128xf32>
    %c86 = arith.constant 86 : index
    %345 = memref.load %arg2[%c86] : memref<128xf32, #tpu.memory_space<smem>>
    %346 = vector.broadcast %345 : f32 to vector<8x128xf32>
    %347 = arith.addf %344, %346 : vector<8x128xf32>
    %c83 = arith.constant 83 : index
    %348 = memref.load %arg2[%c83] : memref<128xf32, #tpu.memory_space<smem>>
    %349 = vector.broadcast %348 : f32 to vector<8x128xf32>
    %350 = arith.mulf %349, %339 : vector<8x128xf32>
    %351 = arith.addf %347, %350 : vector<8x128xf32>
    %c84 = arith.constant 84 : index
    %352 = memref.load %arg2[%c84] : memref<128xf32, #tpu.memory_space<smem>>
    %353 = vector.broadcast %352 : f32 to vector<8x128xf32>
    %354 = arith.mulf %353, %340 : vector<8x128xf32>
    %355 = arith.addf %351, %354 : vector<8x128xf32>
    %c85 = arith.constant 85 : index
    %356 = memref.load %arg2[%c85] : memref<128xf32, #tpu.memory_space<smem>>
    %357 = vector.broadcast %356 : f32 to vector<8x128xf32>
    %358 = arith.mulf %357, %341 : vector<8x128xf32>
    %359 = arith.addf %355, %358 : vector<8x128xf32>
    %360 = math.tanh %359 : vector<8x128xf32>
    %cst = arith.constant 5.000000e-01 : f32
    %361 = vector.broadcast %cst : f32 to vector<8x128xf32>
    %362 = arith.mulf %361, %360 : vector<8x128xf32>
    %cst_24 = arith.constant 5.000000e-01 : f32
    %363 = vector.broadcast %cst_24 : f32 to vector<8x128xf32>
    %364 = arith.addf %362, %363 : vector<8x128xf32>
    %c0_25 = arith.constant 0 : index
    %365 = arith.index_cast %c0_i32 : i32 to index
    %c0_26 = arith.constant 0 : index
    %c0_27 = arith.constant 0 : index
    %366 = vector.load %arg3[%c0_25, %365, %c0_26, %c0_27] : memref<1x1x8x128xf32, #tpu.memory_space<vmem>>, vector<1x1x8x128xf32>
    %367 = vector.shape_cast %366 : vector<1x1x8x128xf32> to vector<8x128xf32>
    %368 = vector.shape_cast %364 : vector<8x128xf32> to vector<1x1x8x128xf32>
    tpu.vector_store %arg3[%c0_25, %365, %c0_26, %c0_27], %368 {strides = array<i32>} : memref<1x1x8x128xf32, #tpu.memory_space<vmem>>, vector<1x1x8x128xf32>,
    %c1_i32 = arith.constant 1 : i32
    return
  }
  func.func @transform_0(%arg0: i32) -> (i32, i32, i32, i32) {
    %c0_i32 = arith.constant 0 : i32
    %c0_i32_0 = arith.constant 0 : i32
    %c0_i32_1 = arith.constant 0 : i32
    %c0_i32_2 = arith.constant 0 : i32
    return %c0_i32, %arg0, %c0_i32_0, %c0_i32_1 : i32, i32, i32, i32
  }
  func.func @transform_1(%arg0: i32) -> i32 {
    %c0_i32 = arith.constant 0 : i32
    %c0_i32_0 = arith.constant 0 : i32
    return %c0_i32 : i32
  }
  func.func @transform_2(%arg0: i32) -> (i32, i32, i32, i32) {
    %c0_i32 = arith.constant 0 : i32
    %c0_i32_0 = arith.constant 0 : i32
    %c0_i32_1 = arith.constant 0 : i32
    %c0_i32_2 = arith.constant 0 : i32
    return %c0_i32, %arg0, %c0_i32_0, %c0_i32_1 : i32, i32, i32, i32
  }
}

</mosaic_0001>

<llo_original>
// kernel: tpu_custom_call.1
$region0: #{tpu_custom_call.1}
  #allocation0 [shape = 'u32[]', space=smem, size = 0x4, offset = 0x4, fixed_abs, tag = 'smem constant byte address 0x4 - core index']
  #allocation1 [shape = 'u32[72,128]{1,0:T(1,128)}', space=vmem, size = 0x9000, scoped, tag = 'internal scratch']
  %s0 = inlined_call_operand.hbm [shape: f32[8,1,8,128], index: 0, kind: input, shape index: {}]
  %s1 = inlined_call_operand.hbm [shape: f32[128], index: 1, kind: input, shape index: {}]
  %s2 = inlined_call_operand.hbm [shape: f32[1,1,8,128], index: 2, kind: output, shape index: {}]
  %s3 = sld [smem:[#allocation0]]
  $region26: #{tpu_custom_call.1} parent=0
    _
  %s5 = ssub.s32 1, %s3
  %s6 = scalar_select 0, %s5, %s3
  $region1: #{tpu_custom_call.1} parent=0
    #allocation2 [shape = 'u8[32768]{0}', space=vmem, size = 0x8000, scoped, tag = 'input window, operand 0, single buffered']
    #allocation3 [shape = 's32[1]{0}', space=sflag, size = 0x4, scoped, tag = 'scoped memory for tpu_custom_call.1']
    #allocation4 [shape = 's32[1]{0}', space=sflag, size = 0x4, scoped, tag = 'scoped memory for tpu_custom_call.1']
    #allocation5 [shape = 's32[1]{0}', space=sflag, size = 0x4, scoped, tag = 'scoped memory for tpu_custom_call.1']
    #allocation6 [shape = 'u8[512]{0}', space=smem, size = 0x200, scoped, tag = 'input window, operand 1, single buffered']
    #allocation7 [shape = 'u8[4096]{0}', space=vmem, size = 0x1000, scoped, tag = 'output window, operand 0, single buffered']
    %7 = vsyncpa [#allocation3], 0
    %8 = vsyncpa [#allocation5], 0
    %9 = vsyncpa [#allocation4], 0
    // Predicated region
    $region2: #{tpu_custom_call.1} parent=1 // pred_check
      _
    $region3: #{tpu_custom_call.1} parent=1 // pred_check_branch
      %11 = sbr.rel (0) target = $region5
    $region4: #{tpu_custom_call.1} parent=1 // pred_region
      %13 = vsyncadd [#allocation3], 0
      %s14 = sshll.u32 %s0, 4
      %s15 = int_to_ptr.hbm [resolvable:$true] %s14
      %s16 = sshll.u32 [#allocation2], 4
      %s17 = int_to_ptr.vmem [resolvable:$true] %s16
      %22 = dma.hbm_to_vmem [thread:$0]  %s15, 1024, %s17, [#allocation3], 128, 128, 8
    $region5: #{tpu_custom_call.1} parent=1 // pred_fallthru
      _
    // Predicated region
    $region6: #{tpu_custom_call.1} parent=1 // pred_check
      _
    $region7: #{tpu_custom_call.1} parent=1 // pred_check_branch
      %24 = sbr.rel (0) target = $region9
    $region8: #{tpu_custom_call.1} parent=1 // pred_region
      %26 = vsyncadd [#allocation5], 0
      %s28 = sshll.u32 %s1, 4
      %s29 = int_to_ptr.hbm [resolvable:$true] %s28
      %31 = dma.hbm_to_smem %s29, 16, [#allocation6], [#allocation5]
    $region9: #{tpu_custom_call.1} parent=1 // pred_fallthru
      _
    // Predicated region
    $region10: #{tpu_custom_call.1} parent=1 // pred_check
      _
    $region11: #{tpu_custom_call.1} parent=1 // pred_check_branch
      %33 = sbr.rel (0) target = $region13
    $region12: #{tpu_custom_call.1} parent=1 // pred_region
      %35 = dma.done [#allocation3], 1024
    $region13: #{tpu_custom_call.1} parent=1 // pred_fallthru
      _
    // Predicated region
    $region14: #{tpu_custom_call.1} parent=1 // pred_check
      _
    $region15: #{tpu_custom_call.1} parent=1 // pred_check_branch
      %37 = sbr.rel (0) target = $region17
    $region16: #{tpu_custom_call.1} parent=1 // pred_region
      %39 = dma.done [#allocation5], 16
    $region17: #{tpu_custom_call.1} parent=1 // pred_fallthru
      _
    %40 = sfence
    %v41 = vld [vmem:[#allocation2] sm:$0xff]
    %s42 = scalar_lea.vmem [#allocation2], 8
    %v43 = vld [vmem:[%s42] sm:$0xff]
    %s44 = scalar_lea.vmem [#allocation2], 16
    %v45 = vld [vmem:[%s44] sm:$0xff]
    %s46 = scalar_lea.vmem [#allocation2], 24
    %v47 = vld [vmem:[%s46] sm:$0xff]
    %s48 = scalar_lea.vmem [#allocation2], 32
    %v49 = vld [vmem:[%s48] sm:$0xff]
    %s50 = scalar_lea.vmem [#allocation2], 40
    %v51 = vld [vmem:[%s50] sm:$0xff]
    %s52 = scalar_lea.vmem [#allocation2], 48
    %v53 = vld [vmem:[%s52] sm:$0xff]
    %s54 = scalar_lea.vmem [#allocation2], 56
    %v55 = vld [vmem:[%s54] sm:$0xff]
    %s56 = sld [smem:[#allocation6]]
    %v57 = vstv %s56
    %v58 = vmul.f32 %v57, %v41
    %s59 = sld [smem:[#allocation6 + $0x30]]
    %v60 = vstv %s59
    %v61 = vadd.f32 %v58, %v60
    %s62 = sld [smem:[#allocation6 + $0x1]]
    %v63 = vstv %s62
    %v64 = vmul.f32 %v63, %v43
    %v65 = vadd.f32 %v61, %v64
    %s66 = sld [smem:[#allocation6 + $0x2]]
    %v67 = vstv %s66
    %v68 = vmul.f32 %v67, %v45
    %v69 = vadd.f32 %v65, %v68
    %s70 = sld [smem:[#allocation6 + $0x3]]
    %v71 = vstv %s70
    %v72 = vmul.f32 %v71, %v47
    %v73 = vadd.f32 %v69, %v72
    %s74 = sld [smem:[#allocation6 + $0x4]]
    %v75 = vstv %s74
    %v76 = vmul.f32 %v75, %v49
    %v77 = vadd.f32 %v73, %v76
    %s78 = sld [smem:[#allocation6 + $0x5]]
    %v79 = vstv %s78
    %v80 = vmul.f32 %v79, %v51
    %v81 = vadd.f32 %v77, %v80
    %s82 = sld [smem:[#allocation6 + $0x6]]
    %v83 = vstv %s82
    %v84 = vmul.f32 %v83, %v53
    %v85 = vadd.f32 %v81, %v84
    %s86 = sld [smem:[#allocation6 + $0x7]]
    %v87 = vstv %s86
    %v88 = vmul.f32 %v87, %v55
    %v89 = vadd.f32 %v85, %v88
    %s90 = sld [smem:[#allocation6 + $0x8]]
    %v91 = vstv %s90
    %v92 = vmul.f32 %v91, %v41
    %s93 = sld [smem:[#allocation6 + $0x31]]
    %v94 = vstv %s93
    %v95 = vadd.f32 %v92, %v94
    %s96 = sld [smem:[#allocation6 + $0x9]]
    %v97 = vstv %s96
    %v98 = vmul.f32 %v97, %v43
    %v99 = vadd.f32 %v95, %v98
    %s100 = sld [smem:[#allocation6 + $0xa]]
    %v101 = vstv %s100
    %v102 = vmul.f32 %v101, %v45
    %v103 = vadd.f32 %v99, %v102
    %s104 = sld [smem:[#allocation6 + $0xb]]
    %v105 = vstv %s104
    %v106 = vmul.f32 %v105, %v47
    %v107 = vadd.f32 %v103, %v106
    %s108 = sld [smem:[#allocation6 + $0xc]]
    %v109 = vstv %s108
    %v110 = vmul.f32 %v109, %v49
    %v111 = vadd.f32 %v107, %v110
    %s112 = sld [smem:[#allocation6 + $0xd]]
    %v113 = vstv %s112
    %v114 = vmul.f32 %v113, %v51
    %v115 = vadd.f32 %v111, %v114
    %s116 = sld [smem:[#allocation6 + $0xe]]
    %v117 = vstv %s116
    %v118 = vmul.f32 %v117, %v53
    %v119 = vadd.f32 %v115, %v118
    %s120 = sld [smem:[#allocation6 + $0xf]]
    %v121 = vstv %s120
    %v122 = vmul.f32 %v121, %v55
    %v123 = vadd.f32 %v119, %v122
    %s124 = sld [smem:[#allocation6 + $0x10]]
    %v125 = vstv %s124
    %v126 = vmul.f32 %v125, %v41
    %s127 = sld [smem:[#allocation6 + $0x32]]
    %v128 = vstv %s127
    %v129 = vadd.f32 %v126, %v128
    %s130 = sld [smem:[#allocation6 + $0x11]]
    %v131 = vstv %s130
    %v132 = vmul.f32 %v131, %v43
    %v133 = vadd.f32 %v129, %v132
    %s134 = sld [smem:[#allocation6 + $0x12]]
    %v135 = vstv %s134
    %v136 = vmul.f32 %v135, %v45
    %v137 = vadd.f32 %v133, %v136
    %s138 = sld [smem:[#allocation6 + $0x13]]
    %v139 = vstv %s138
    %v140 = vmul.f32 %v139, %v47
    %v141 = vadd.f32 %v137, %v140
    %s142 = sld [smem:[#allocation6 + $0x14]]
    %v143 = vstv %s142
    %v144 = vmul.f32 %v143, %v49
    %v145 = vadd.f32 %v141, %v144
    %s146 = sld [smem:[#allocation6 + $0x15]]
    %v147 = vstv %s146
    %v148 = vmul.f32 %v147, %v51
    %v149 = vadd.f32 %v145, %v148
    %s150 = sld [smem:[#allocation6 + $0x16]]
    %v151 = vstv %s150
    %v152 = vmul.f32 %v151, %v53
    %v153 = vadd.f32 %v149, %v152
    %s154 = sld [smem:[#allocation6 + $0x17]]
    %v155 = vstv %s154
    %v156 = vmul.f32 %v155, %v55
    %v157 = vadd.f32 %v153, %v156
    %s158 = sld [smem:[#allocation6 + $0x18]]
    %v159 = vstv %s158
    %v160 = vmul.f32 %v159, %v41
    %s161 = sld [smem:[#allocation6 + $0x33]]
    %v162 = vstv %s161
    %v163 = vadd.f32 %v160, %v162
    %s164 = sld [smem:[#allocation6 + $0x19]]
    %v165 = vstv %s164
    %v166 = vmul.f32 %v165, %v43
    %v167 = vadd.f32 %v163, %v166
    %s168 = sld [smem:[#allocation6 + $0x1a]]
    %v169 = vstv %s168
    %v170 = vmul.f32 %v169, %v45
    %v171 = vadd.f32 %v167, %v170
    %s172 = sld [smem:[#allocation6 + $0x1b]]
    %v173 = vstv %s172
    %v174 = vmul.f32 %v173, %v47
    %v175 = vadd.f32 %v171, %v174
    %s176 = sld [smem:[#allocation6 + $0x1c]]
    %v177 = vstv %s176
    %v178 = vmul.f32 %v177, %v49
    %v179 = vadd.f32 %v175, %v178
    %s180 = sld [smem:[#allocation6 + $0x1d]]
    %v181 = vstv %s180
    %v182 = vmul.f32 %v181, %v51
    %v183 = vadd.f32 %v179, %v182
    %s184 = sld [smem:[#allocation6 + $0x1e]]
    %v185 = vstv %s184
    %v186 = vmul.f32 %v185, %v53
    %v187 = vadd.f32 %v183, %v186
    %s188 = sld [smem:[#allocation6 + $0x1f]]
    %v189 = vstv %s188
    %v190 = vmul.f32 %v189, %v55
    %v191 = vadd.f32 %v187, %v190
    %s192 = sld [smem:[#allocation6 + $0x20]]
    %v193 = vstv %s192
    %v194 = vmul.f32 %v193, %v41
    %s195 = sld [smem:[#allocation6 + $0x34]]
    %v196 = vstv %s195
    %v197 = vadd.f32 %v194, %v196
    %s198 = sld [smem:[#allocation6 + $0x21]]
    %v199 = vstv %s198
    %v200 = vmul.f32 %v199, %v43
    %v201 = vadd.f32 %v197, %v200
    %s202 = sld [smem:[#allocation6 + $0x22]]
    %v203 = vstv %s202
    %v204 = vmul.f32 %v203, %v45
    %v205 = vadd.f32 %v201, %v204
    %s206 = sld [smem:[#allocation6 + $0x23]]
    %v207 = vstv %s206
    %v208 = vmul.f32 %v207, %v47
    %v209 = vadd.f32 %v205, %v208
    %s210 = sld [smem:[#allocation6 + $0x24]]
    %v211 = vstv %s210
    %v212 = vmul.f32 %v211, %v49
    %v213 = vadd.f32 %v209, %v212
    %s214 = sld [smem:[#allocation6 + $0x25]]
    %v215 = vstv %s214
    %v216 = vmul.f32 %v215, %v51
    %v217 = vadd.f32 %v213, %v216
    %s218 = sld [smem:[#allocation6 + $0x26]]
    %v219 = vstv %s218
    %v220 = vmul.f32 %v219, %v53
    %v221 = vadd.f32 %v217, %v220
    %s222 = sld [smem:[#allocation6 + $0x27]]
    %v223 = vstv %s222
    %v224 = vmul.f32 %v223, %v55
    %v225 = vadd.f32 %v221, %v224
    %s226 = sld [smem:[#allocation6 + $0x28]]
    %v227 = vstv %s226
    %v228 = vmul.f32 %v227, %v41
    %s229 = sld [smem:[#allocation6 + $0x35]]
    %v230 = vstv %s229
    %v231 = vadd.f32 %v228, %v230
    %s232 = sld [smem:[#allocation6 + $0x29]]
    %v233 = vstv %s232
    %v234 = vmul.f32 %v233, %v43
    %v235 = vadd.f32 %v231, %v234
    %s236 = sld [smem:[#allocation6 + $0x2a]]
    %v237 = vstv %s236
    %v238 = vmul.f32 %v237, %v45
    %v239 = vadd.f32 %v235, %v238
    %s240 = sld [smem:[#allocation6 + $0x2b]]
    %v241 = vstv %s240
    %v242 = vmul.f32 %v241, %v47
    %v243 = vadd.f32 %v239, %v242
    %s244 = sld [smem:[#allocation6 + $0x2c]]
    %v245 = vstv %s244
    %v246 = vmul.f32 %v245, %v49
    %v247 = vadd.f32 %v243, %v246
    %s248 = sld [smem:[#allocation6 + $0x2d]]
    %v249 = vstv %s248
    %v250 = vmul.f32 %v249, %v51
    %v251 = vadd.f32 %v247, %v250
    %s252 = sld [smem:[#allocation6 + $0x2e]]
    %v253 = vstv %s252
    %v254 = vmul.f32 %v253, %v53
    %v255 = vadd.f32 %v251, %v254
    %s256 = sld [smem:[#allocation6 + $0x2f]]
    %v257 = vstv %s256
    %v258 = vmul.f32 %v257, %v55
    %v259 = vadd.f32 %v255, %v258
    %v260 = vtanh.pop %v89
    %v261 = vtanh.pop %v123
    %v262 = vtanh.pop %v157
    %v263 = vtanh.pop %v191
    %v264 = vtanh.pop %v225
    %v265 = vtanh.pop %v259
    %s266 = sld [smem:[#allocation6 + $0x36]]
    %v267 = vstv %s266
    %v268 = vmul.f32 %v267, %v260
    %s269 = sld [smem:[#allocation6 + $0x4e]]
    %v270 = vstv %s269
    %v271 = vadd.f32 %v268, %v270
    %s272 = sld [smem:[#allocation6 + $0x37]]
    %v273 = vstv %s272
    %v274 = vmul.f32 %v273, %v261
    %v275 = vadd.f32 %v271, %v274
    %s276 = sld [smem:[#allocation6 + $0x38]]
    %v277 = vstv %s276
    %v278 = vmul.f32 %v277, %v262
    %v279 = vadd.f32 %v275, %v278
    %s280 = sld [smem:[#allocation6 + $0x39]]
    %v281 = vstv %s280
    %v282 = vmul.f32 %v281, %v263
    %v283 = vadd.f32 %v279, %v282
    %s284 = sld [smem:[#allocation6 + $0x3a]]
    %v285 = vstv %s284
    %v286 = vmul.f32 %v285, %v264
    %v287 = vadd.f32 %v283, %v286
    %s288 = sld [smem:[#allocation6 + $0x3b]]
    %v289 = vstv %s288
    %v290 = vmul.f32 %v289, %v265
    %v291 = vadd.f32 %v287, %v290
    %s292 = sld [smem:[#allocation6 + $0x3c]]
    %v293 = vstv %s292
    %v294 = vmul.f32 %v293, %v260
    %s295 = sld [smem:[#allocation6 + $0x4f]]
    %v296 = vstv %s295
    %v297 = vadd.f32 %v294, %v296
    %s298 = sld [smem:[#allocation6 + $0x3d]]
    %v299 = vstv %s298
    %v300 = vmul.f32 %v299, %v261
    %v301 = vadd.f32 %v297, %v300
    %s302 = sld [smem:[#allocation6 + $0x3e]]
    %v303 = vstv %s302
    %v304 = vmul.f32 %v303, %v262
    %v305 = vadd.f32 %v301, %v304
    %s306 = sld [smem:[#allocation6 + $0x3f]]
    %v307 = vstv %s306
    %v308 = vmul.f32 %v307, %v263
    %v309 = vadd.f32 %v305, %v308
    %s310 = sld [smem:[#allocation6 + $0x40]]
    %v311 = vstv %s310
    %v312 = vmul.f32 %v311, %v264
    %v313 = vadd.f32 %v309, %v312
    %s314 = sld [smem:[#allocation6 + $0x41]]
    %v315 = vstv %s314
    %v316 = vmul.f32 %v315, %v265
    %v317 = vadd.f32 %v313, %v316
    %s318 = sld [smem:[#allocation6 + $0x42]]
    %v319 = vstv %s318
    %v320 = vmul.f32 %v319, %v260
    %s321 = sld [smem:[#allocation6 + $0x50]]
    %v322 = vstv %s321
    %v323 = vadd.f32 %v320, %v322
    %s324 = sld [smem:[#allocation6 + $0x43]]
    %v325 = vstv %s324
    %v326 = vmul.f32 %v325, %v261
    %v327 = vadd.f32 %v323, %v326
    %s328 = sld [smem:[#allocation6 + $0x44]]
    %v329 = vstv %s328
    %v330 = vmul.f32 %v329, %v262
    %v331 = vadd.f32 %v327, %v330
    %s332 = sld [smem:[#allocation6 + $0x45]]
    %v333 = vstv %s332
    %v334 = vmul.f32 %v333, %v263
    %v335 = vadd.f32 %v331, %v334
    %s336 = sld [smem:[#allocation6 + $0x46]]
    %v337 = vstv %s336
    %v338 = vmul.f32 %v337, %v264
    %v339 = vadd.f32 %v335, %v338
    %s340 = sld [smem:[#allocation6 + $0x47]]
    %v341 = vstv %s340
    %v342 = vmul.f32 %v341, %v265
    %v343 = vadd.f32 %v339, %v342
    %s344 = sld [smem:[#allocation6 + $0x48]]
    %v345 = vstv %s344
    %v346 = vmul.f32 %v345, %v260
    %s347 = sld [smem:[#allocation6 + $0x51]]
    %v348 = vstv %s347
    %v349 = vadd.f32 %v346, %v348
    %s350 = sld [smem:[#allocation6 + $0x49]]
    %v351 = vstv %s350
    %v352 = vmul.f32 %v351, %v261
    %v353 = vadd.f32 %v349, %v352
    %s354 = sld [smem:[#allocation6 + $0x4a]]
    %v355 = vstv %s354
    %v356 = vmul.f32 %v355, %v262
    %v357 = vadd.f32 %v353, %v356
    %s358 = sld [smem:[#allocation6 + $0x4b]]
    %v359 = vstv %s358
    %v360 = vmul.f32 %v359, %v263
    %v361 = vadd.f32 %v357, %v360
    %s362 = sld [smem:[#allocation6 + $0x4c]]
    %v363 = vstv %s362
    %v364 = vmul.f32 %v363, %v264
    %v365 = vadd.f32 %v361, %v364
    %s366 = sld [smem:[#allocation6 + $0x4d]]
    %v367 = vstv %s366
    %v368 = vmul.f32 %v367, %v265
    %v369 = vadd.f32 %v365, %v368
    %v370 = vtanh.pop %v291
    %v371 = vtanh.pop %v317
    %v372 = vtanh.pop %v343
    %v373 = vtanh.pop %v369
    %s374 = sld [smem:[#allocation6 + $0x52]]
    %v375 = vstv %s374
    %v376 = vmul.f32 %v375, %v370
    %s377 = sld [smem:[#allocation6 + $0x56]]
    %v378 = vstv %s377
    %v379 = vadd.f32 %v376, %v378
    %s380 = sld [smem:[#allocation6 + $0x53]]
    %v381 = vstv %s380
    %v382 = vmul.f32 %v381, %v371
    %v383 = vadd.f32 %v379, %v382
    %s384 = sld [smem:[#allocation6 + $0x54]]
    %v385 = vstv %s384
    %v386 = vmul.f32 %v385, %v372
    %v387 = vadd.f32 %v383, %v386
    %s388 = sld [smem:[#allocation6 + $0x55]]
    %v389 = vstv %s388
    %v390 = vmul.f32 %v389, %v373
    %v391 = vadd.f32 %v387, %v390
    %v392 = vtanh.pop %v391
    %v393 = vmul.f32 %v392, 0.5
    %v394 = vadd.f32 %v393, 0.5
    %395 = vst [vmem:[#allocation7] sm:$0xff] %v394
    // Predicated region
    $region18: #{tpu_custom_call.1} parent=1 // pred_check
      _
    $region19: #{tpu_custom_call.1} parent=1 // pred_check_branch
      %397 = sbr.rel (0) target = $region21
    $region20: #{tpu_custom_call.1} parent=1 // pred_region
      %399 = vsyncadd [#allocation4], 0
      %s401 = sshll.u32 [#allocation7], 4
      %s402 = int_to_ptr.vmem [resolvable:$true] %s401
      %s403 = sshll.u32 %s2, 4
      %s404 = int_to_ptr.hbm [resolvable:$true] %s403
      %406 = dma.vmem_to_hbm [thread:$0]  %s402, 128, %s404, [#allocation4]
    $region21: #{tpu_custom_call.1} parent=1 // pred_fallthru
      _
    // Predicated region
    $region22: #{tpu_custom_call.1} parent=1 // pred_check
      _
    $region23: #{tpu_custom_call.1} parent=1 // pred_check_branch
      %408 = sbr.rel (0) target = $region25
    $region24: #{tpu_custom_call.1} parent=1 // pred_region
      %410 = dma.done [#allocation4], 128
    $region25: #{tpu_custom_call.1} parent=1 // pred_fallthru
      _
    %411 = vsyncpa [#allocation3], 1
    %412 = vsyncpa [#allocation4], 1
    %413 = vsyncpa [#allocation5], 1

</llo_original>
